<compile_context>
chip_gen: v7x
topology: tpu7x:2x2x1
jax: 0.10.0
libtpu: 0.0.40
codegen_flags: <defaults>
</compile_context>

<pallas_src>
import functools

import jax
import jax.numpy as jnp
from jax import lax
from jax.experimental import pallas as pl
from jax.experimental.pallas import tpu as pltpu


def _round_up(x, m):
    return (x + m - 1) // m * m


def abmil_kernel(h_ref, wab_ref, bab_ref, ww_ref, bw_ref, wc_ref, bc_ref,
                 y_ref, attn_ref, m_ref, l_ref,
                 acc_ref,
                 *, n_valid, tile_n, att_dim):
    i = pl.program_id(0)
    n_tiles = pl.num_programs(0)

    @pl.when(i == 0)
    def _init():
        m_ref[...] = jnp.full_like(m_ref, -jnp.inf)
        l_ref[...] = jnp.zeros_like(l_ref)
        acc_ref[...] = jnp.zeros_like(acc_ref)

    h = h_ref[...]                                   # (tile_n, L) bf16

    # Fused gating matmul: one MXU pass per tile through (L, 2D) bf16 weights,
    # f32 accumulation; tanh/sigmoid go to the EUP.
    ab = jnp.dot(h, wab_ref[...],
                 preferred_element_type=jnp.float32) + bab_ref[...]   # (tile_n, 2D)
    a = jnp.tanh(ab[:, :att_dim])
    b = jax.nn.sigmoid(ab[:, att_dim:])
    gated = a * b                                    # (tile_n, D) f32

    # Attention logits directly in (K, tile_n) layout: contract D of Ww (K, D)
    # with D of gated (tile_n, D) -> no (N, K) -> (K, N) transpose/relayout.
    logits = lax.dot_general(
        ww_ref[...], gated,
        dimension_numbers=(((1,), (1,)), ((), ())),
        preferred_element_type=jnp.float32) + bw_ref[...]             # (K, tile_n)

    # Mask padded instances (only ever present in the last tile) out of the
    # softmax statistics.  Cheap VPU filler for K=1; skipped entirely when N
    # divides tile_n.
    if n_valid % tile_n != 0:
        col = i * tile_n + lax.broadcasted_iota(jnp.int32, logits.shape, 1)
        logits = jnp.where(col < n_valid, logits, -1e30)

    # Online (flash-style) softmax statistics + rescaled A @ H accumulator.
    m_prev = m_ref[...]                                               # (K, 1)
    m_new = jnp.maximum(m_prev, jnp.max(logits, axis=1, keepdims=True))
    alpha = jnp.exp(m_prev - m_new)                                   # (K, 1)
    p = jnp.exp(logits - m_new)                                       # (K, tile_n)
    l_ref[...] = alpha * l_ref[...] + jnp.sum(p, axis=1, keepdims=True)
    acc_ref[...] = alpha * acc_ref[...] + jnp.dot(
        p.astype(h.dtype), h, preferred_element_type=jnp.float32)     # (K, L) f32
    m_ref[...] = m_new

    # Stream the raw logits out through a grid-tiled output block (pipelined
    # write-back); the wrapper applies the final softmax normalization.
    attn_ref[0] = logits

    @pl.when(i == n_tiles - 1)
    def _finalize():
        bag = acc_ref[...] / l_ref[...]              # exact divide; runs once
        y_ref[...] = (jnp.dot(bag, wc_ref[...],
                              preferred_element_type=jnp.float32)
                      + bc_ref[...]).astype(y_ref.dtype)


def abmil_forward(x, params, *, tile_n=2048):
    """x: (1, N, L) float32.  Returns (Y_prob (K, C), A (K, N)).

    tile_n: rows of H per grid step.  2048 is safe on v7x's 64 MiB VMEM for
    large L now that H streams in bf16 and the attention map is not VMEM
    resident; raise to 4096-8192 (and optionally pipeline_mode=pl.Buffered(3)
    on the H spec) on v5e/v6e's 128 MiB.
    """
    H = x.reshape(x.shape[-2], x.shape[-1])          # squeeze(0) -> (N, L)
    N, L = H.shape
    D = params["wa"].shape[1]
    K = params["ww"].shape[0]
    C = params["wc"].shape[1]

    tile_n = min(tile_n, _round_up(N, 16))           # 16: bf16 sublane packing
    n_pad = _round_up(N, tile_n)
    n_tiles = n_pad // tile_n
    if n_pad != N:
        H = jnp.pad(H, ((0, n_pad - N), (0, 0)))
    H = H.astype(jnp.bfloat16)                       # dominant HBM stream in bf16

    # Fused gating weights (bf16, native MXU dtype); biases stay f32 and are
    # added after the f32-accumulated matmul.
    wab = jnp.concatenate([params["wa"], params["wb"]], axis=1).astype(jnp.bfloat16)
    bab = jnp.concatenate([params["ba"], params["bb"]], axis=1)

    # Constant-index-map specs: DMAed once, resident in VMEM across all tiles.
    def resident(shape):
        nd = len(shape)
        return pl.BlockSpec(shape, lambda i, _nd=nd: (0,) * _nd)

    in_specs = [
        pl.BlockSpec((tile_n, L), lambda i: (i, 0)),  # bf16 H stream (double-buffered)
        resident((L, 2 * D)), resident((1, 2 * D)),   # Wa|Wb (bf16), ba|bb
        resident((K, D)), resident((K, 1)),           # Ww, bw
        resident((L, C)), resident((1, C)),           # Wc, bc
    ]
    out_specs = (
        resident((K, C)),                             # Y_prob (written on last step)
        pl.BlockSpec((1, K, tile_n), lambda i: (i, 0, 0)),   # raw logits, streamed
        resident((K, 1)),                             # final running max m
        resident((K, 1)),                             # final running sum l
    )
    out_shape = (
        jax.ShapeDtypeStruct((K, C), jnp.float32),
        jax.ShapeDtypeStruct((n_tiles, K, tile_n), jnp.float32),
        jax.ShapeDtypeStruct((K, 1), jnp.float32),
        jax.ShapeDtypeStruct((K, 1), jnp.float32),
    )

    flops = (4 * n_pad * L * D          # fused gating matmul (L x 2D)
             + 2 * n_pad * D * K        # attention logits
             + 2 * K * n_pad * L        # A @ H accumulation
             + 2 * K * L * C)           # classifier head
    transcendentals = 2 * n_pad * D + K * n_pad
    bytes_accessed = (n_pad * L * 2                     # bf16 H (read once)
                      + L * 2 * D * 2                   # bf16 Wa|Wb
                      + (K * D + L * C + 2 * D + K + C) * 4
                      + (K * C + n_tiles * K * tile_n + 2 * K) * 4)

    kernel = functools.partial(abmil_kernel, n_valid=N, tile_n=tile_n, att_dim=D)

    y_prob, attn_logits, m_fin, l_fin = pl.pallas_call(
        kernel,
        out_shape=out_shape,
        grid_spec=pltpu.PrefetchScalarGridSpec(
            num_scalar_prefetch=0,
            grid=(n_tiles,),
            in_specs=in_specs,
            out_specs=out_specs,
            scratch_shapes=[
                pltpu.VMEM((K, L), jnp.float32),   # rescaled A @ H accumulator
            ],
        ),
        compiler_params=pltpu.CompilerParams(
            dimension_semantics=("arbitrary",),     # N axis carries the accumulators
            vmem_limit_bytes=48 * 1024 * 1024,      # below v7x's 64 MiB; raise on v5e/v6e
        ),
        cost_estimate=pl.CostEstimate(
            flops=flops,
            transcendentals=transcendentals,
            bytes_accessed=bytes_accessed,
        ),
    )(
        H,
        wab, bab,
        params["ww"], params["bw"],
        params["wc"], params["bc"],
    )

    # Exact softmax normalization of the streamed raw logits: one small XLA
    # elementwise op over (K, N) (layout plumbing + exp outside the kernel).
    logits_full = attn_logits.transpose(1, 0, 2).reshape(K, n_pad)
    attn = (jnp.exp(logits_full - m_fin) / l_fin)[:, :N]
    return y_prob, attn


def init_params(key, input_size, num_classes, D=256, K=1):
    """Deterministic init. Layouts: Wa/Wb (L, D), Ww (K, D), Wc (L, C),
    ba/bb (1, D), bw (K, 1), bc (1, C)."""
    ks = jax.random.split(key, 8)

    def lin(kw, kb, fan_in, fan_out):
        bound = 1.0 / jnp.sqrt(fan_in)
        w = jax.random.uniform(kw, (fan_in, fan_out), jnp.float32, -bound, bound)
        b = jax.random.uniform(kb, (1, fan_out), jnp.float32, -bound, bound)
        return w, b

    wa, ba = lin(ks[0], ks[1], input_size, D)
    wb, bb = lin(ks[2], ks[3], input_size, D)
    ww, bw = lin(ks[4], ks[5], D, K)
    wc, bc = lin(ks[6], ks[7], input_size, num_classes)
    return dict(wa=wa, ba=ba, wb=wb, bb=bb,
                ww=ww.T, bw=bw.reshape(K, 1), wc=wc, bc=bc)


def abmil_reference(x, params):
    """Pure-JAX reference of the PyTorch forward."""
    H = x.reshape(x.shape[-2], x.shape[-1])
    a = jnp.tanh(H @ params["wa"] + params["ba"])
    b = jax.nn.sigmoid(H @ params["wb"] + params["bb"])
    logits = (a * b) @ params["ww"].T + params["bw"].T     # (N, K)
    A = jax.nn.softmax(logits.T, axis=1)                   # (K, N)
    M = A @ H                                              # (K, L)
    Y = M @ params["wc"] + params["bc"]                    # (K, C)
    return Y, A


if __name__ == "__main__":
    input_size = 32      # L
    num_classes = 4      # C

    key = jax.random.PRNGKey(0)
    k_param, k_x1, k_x2 = jax.random.split(key, 3)
    params = init_params(k_param, input_size, num_classes)

    # --- small bag (single tile, padded to the bf16 sublane multiple) ---
    n1 = 8
    x1 = jax.random.normal(k_x1, (1, n1, input_size), jnp.float32)
    y1, a1 = abmil_forward(x1, params)
    jax.block_until_ready((y1, a1))
    y1_ref, a1_ref = abmil_reference(x1, params)

    assert y1.shape == (1, num_classes)
    assert a1.shape == (1, n1)
    assert jnp.allclose(jnp.sum(a1), 1.0, atol=5e-3)
    assert jnp.allclose(a1, a1_ref, atol=2e-2, rtol=2e-2)
    assert jnp.allclose(y1, y1_ref, atol=2e-2, rtol=2e-2)

    # --- larger bag exercising multiple N tiles + padded-tile masking ---
    n2 = 200
    x2 = jax.random.normal(k_x2, (1, n2, input_size), jnp.float32)
    y2, a2 = abmil_forward(x2, params, tile_n=128)   # 2 tiles, last one padded
    jax.block_until_ready((y2, a2))
    y2_ref, a2_ref = abmil_reference(x2, params)

    assert y2.shape == (1, num_classes)
    assert a2.shape == (1, n2)
    assert jnp.allclose(jnp.sum(a2), 1.0, atol=5e-3)
    assert jnp.allclose(a2, a2_ref, atol=2e-2, rtol=2e-2)
    assert jnp.allclose(y2, y2_ref, atol=2e-2, rtol=2e-2)

    print("KERNEL_OK")
</pallas_src>

<mosaic_0001>
module attributes {stable_mosaic.version = 11 : i64} {
  func.func @abmil_kernel(%arg0: i32, %arg1: memref<16x32xbf16, #tpu.memory_space<vmem>>, %arg2: memref<32x512xbf16, #tpu.memory_space<vmem>>, %arg3: memref<1x512xf32, #tpu.memory_space<vmem>>, %arg4: memref<1x256xf32, #tpu.memory_space<vmem>>, %arg5: memref<1x1xf32, #tpu.memory_space<vmem>>, %arg6: memref<32x4xf32, #tpu.memory_space<vmem>>, %arg7: memref<1x4xf32, #tpu.memory_space<vmem>>, %arg8: memref<1x4xf32, #tpu.memory_space<vmem>>, %arg9: memref<1x1x16xf32, #tpu.memory_space<vmem>>, %arg10: memref<1x1xf32, #tpu.memory_space<vmem>>, %arg11: memref<1x1xf32, #tpu.memory_space<vmem>>, %arg12: memref<1x32xf32, #tpu.memory_space<vmem>>) attributes {dimension_semantics = [#tpu.dimension_semantics<arbitrary>], iteration_bounds = array<i64: 1>, scalar_prefetch = 0 : i64, scratch_operands = 1 : i64, tpu.core_type = #tpu.core_type<tc>, window_params = [{transform_indices = @transform_0, window_bounds = array<i64: 16, 32>}, {pipeline_mode = #tpu.pipeline_mode<synchronous>, transform_indices = @transform_1, window_bounds = array<i64: 32, 512>}, {pipeline_mode = #tpu.pipeline_mode<synchronous>, transform_indices = @transform_2, window_bounds = array<i64: 1, 512>}, {pipeline_mode = #tpu.pipeline_mode<synchronous>, transform_indices = @transform_3, window_bounds = array<i64: 1, 256>}, {pipeline_mode = #tpu.pipeline_mode<synchronous>, transform_indices = @transform_4, window_bounds = array<i64: 1, 1>}, {pipeline_mode = #tpu.pipeline_mode<synchronous>, transform_indices = @transform_5, window_bounds = array<i64: 32, 4>}, {pipeline_mode = #tpu.pipeline_mode<synchronous>, transform_indices = @transform_6, window_bounds = array<i64: 1, 4>}, {pipeline_mode = #tpu.pipeline_mode<synchronous>, transform_indices = @transform_7, window_bounds = array<i64: 1, 4>}, {transform_indices = @transform_8, window_bounds = array<i64: 1, 1, 16>}, {pipeline_mode = #tpu.pipeline_mode<synchronous>, transform_indices = @transform_9, window_bounds = array<i64: 1, 1>}, {pipeline_mode = #tpu.pipeline_mode<synchronous>, transform_indices = @transform_10, window_bounds = array<i64: 1, 1>}]} {
    %c0_i32 = arith.constant 0 : i32
    %0 = arith.cmpi eq, %arg0, %c0_i32 : i32
    %1 = arith.extui %0 : i1 to i32
    %c0_i32_0 = arith.constant 0 : i32
    %2 = arith.cmpi ne, %1, %c0_i32_0 : i32
    scf.if %2 {
      %cst_33 = arith.constant 0xFF800000 : f32
      %60 = vector.broadcast %cst_33 : f32 to vector<1x1xf32>
      %c0_34 = arith.constant 0 : index
      %c0_35 = arith.constant 0 : index
      %61 = vector.load %arg10[%c0_34, %c0_35] : memref<1x1xf32, #tpu.memory_space<vmem>>, vector<1x1xf32>
      tpu.vector_store %arg10[%c0_34, %c0_35], %60 {strides = array<i32>} : memref<1x1xf32, #tpu.memory_space<vmem>>, vector<1x1xf32>,
      %cst_36 = arith.constant 0.000000e+00 : f32
      %62 = vector.broadcast %cst_36 : f32 to vector<1x1xf32>
      %c0_37 = arith.constant 0 : index
      %c0_38 = arith.constant 0 : index
      %63 = vector.load %arg11[%c0_37, %c0_38] : memref<1x1xf32, #tpu.memory_space<vmem>>, vector<1x1xf32>
      tpu.vector_store %arg11[%c0_37, %c0_38], %62 {strides = array<i32>} : memref<1x1xf32, #tpu.memory_space<vmem>>, vector<1x1xf32>,
      %cst_39 = arith.constant 0.000000e+00 : f32
      %64 = vector.broadcast %cst_39 : f32 to vector<1x32xf32>
      %c0_40 = arith.constant 0 : index
      %c0_41 = arith.constant 0 : index
      %65 = vector.load %arg12[%c0_40, %c0_41] : memref<1x32xf32, #tpu.memory_space<vmem>>, vector<1x32xf32>
      tpu.vector_store %arg12[%c0_40, %c0_41], %64 {strides = array<i32>} : memref<1x32xf32, #tpu.memory_space<vmem>>, vector<1x32xf32>,
    } else {
    }
    %c0 = arith.constant 0 : index
    %c0_1 = arith.constant 0 : index
    %3 = vector.load %arg1[%c0, %c0_1] : memref<16x32xbf16, #tpu.memory_space<vmem>>, vector<16x32xbf16>
    %c0_2 = arith.constant 0 : index
    %c0_3 = arith.constant 0 : index
    %4 = vector.load %arg2[%c0_2, %c0_3] : memref<32x512xbf16, #tpu.memory_space<vmem>>, vector<32x512xbf16>
    %cst = arith.constant dense<0.000000e+00> : vector<16x512xf32>
    %5 = tpu.matmul %3, %4, %cst {dimension_numbers = #tpu.dot_dimension_numbers<[1], [0], [0], [1], [0, 0, 1, 1], [], []>} : vector<16x32xbf16>, vector<32x512xbf16>, vector<16x512xf32> -> vector<16x512xf32>
    %c0_4 = arith.constant 0 : index
    %c0_5 = arith.constant 0 : index
    %6 = vector.load %arg3[%c0_4, %c0_5] : memref<1x512xf32, #tpu.memory_space<vmem>>, vector<1x512xf32>
    %7 = vector.broadcast %6 : vector<1x512xf32> to vector<16x512xf32>
    %8 = arith.addf %5, %7 : vector<16x512xf32>
    %9 = vector.extract_strided_slice %8 {offsets = [0, 0], sizes = [16, 256], strides = [1, 1]} : vector<16x512xf32> to vector<16x256xf32>
    %10 = math.tanh %9 : vector<16x256xf32>
    %11 = vector.extract_strided_slice %8 {offsets = [0, 256], sizes = [16, 256], strides = [1, 1]} : vector<16x512xf32> to vector<16x256xf32>
    %12 = arith.negf %11 : vector<16x256xf32>
    %13 = math.exp %12 : vector<16x256xf32>
    %cst_6 = arith.constant 1.000000e+00 : f32
    %14 = vector.broadcast %cst_6 : f32 to vector<16x256xf32>
    %15 = arith.addf %14, %13 : vector<16x256xf32>
    %16 = arith.divf %14, %15 : vector<16x256xf32>
    %17 = arith.mulf %10, %16 : vector<16x256xf32>
    %c0_7 = arith.constant 0 : index
    %c0_8 = arith.constant 0 : index
    %18 = vector.load %arg4[%c0_7, %c0_8] : memref<1x256xf32, #tpu.memory_space<vmem>>, vector<1x256xf32>
    %cst_9 = arith.constant dense<0.000000e+00> : vector<1x16xf32>
    %19 = tpu.matmul %18, %17, %cst_9 {dimension_numbers = #tpu.dot_dimension_numbers<[1], [1], [0], [0], [0, 0, 1, 0], [], []>} : vector<1x256xf32>, vector<16x256xf32>, vector<1x16xf32> -> vector<1x16xf32>
    %c0_10 = arith.constant 0 : index
    %c0_11 = arith.constant 0 : index
    %20 = vector.load %arg5[%c0_10, %c0_11] : memref<1x1xf32, #tpu.memory_space<vmem>>, vector<1x1xf32>
    %21 = vector.broadcast %20 : vector<1x1xf32> to vector<1x16xf32>
    %22 = arith.addf %19, %21 : vector<1x16xf32>
    %c16_i32 = arith.constant 16 : i32
    %23 = arith.muli %arg0, %c16_i32 : i32
    %24 = tpu.iota {dimensions = array<i32: 1>} : vector<1x16xi32>
    %25 = vector.broadcast %23 : i32 to vector<1x16xi32>
    %26 = arith.addi %25, %24 : vector<1x16xi32>
    %c8_i32 = arith.constant 8 : i32
    %27 = vector.broadcast %c8_i32 : i32 to vector<1x16xi32>
    %28 = arith.cmpi slt, %26, %27 : vector<1x16xi32>
    %cst_12 = arith.constant -1.000000e+30 : f32
    %29 = vector.broadcast %cst_12 : f32 to vector<1x16xf32>
    %30 = arith.select %28, %22, %29 : vector<1x16xi1>, vector<1x16xf32>
    %c0_13 = arith.constant 0 : index
    %c0_14 = arith.constant 0 : index
    %31 = vector.load %arg10[%c0_13, %c0_14] : memref<1x1xf32, #tpu.memory_space<vmem>>, vector<1x1xf32>
    %cst_15 = arith.constant dense<0xFF800000> : vector<1xf32>
    %32 = vector.multi_reduction <maximumf>, %30, %cst_15 [1] : vector<1x16xf32> to vector<1xf32>
    %33 = vector.shape_cast %32 : vector<1xf32> to vector<1x1xf32>
    %34 = arith.maximumf %31, %33 : vector<1x1xf32>
    %35 = arith.subf %31, %34 : vector<1x1xf32>
    %36 = math.exp %35 : vector<1x1xf32>
    %37 = vector.broadcast %34 : vector<1x1xf32> to vector<1x16xf32>
    %38 = arith.subf %30, %37 : vector<1x16xf32>
    %39 = math.exp %38 : vector<1x16xf32>
    %c0_16 = arith.constant 0 : index
    %c0_17 = arith.constant 0 : index
    %40 = vector.load %arg11[%c0_16, %c0_17] : memref<1x1xf32, #tpu.memory_space<vmem>>, vector<1x1xf32>
    %41 = arith.mulf %36, %40 : vector<1x1xf32>
    %cst_18 = arith.constant dense<0.000000e+00> : vector<1xf32>
    %42 = vector.multi_reduction <add>, %39, %cst_18 [1] : vector<1x16xf32> to vector<1xf32>
    %43 = vector.shape_cast %42 : vector<1xf32> to vector<1x1xf32>
    %44 = arith.addf %41, %43 : vector<1x1xf32>
    %c0_19 = arith.constant 0 : index
    %c0_20 = arith.constant 0 : index
    %45 = vector.load %arg11[%c0_19, %c0_20] : memref<1x1xf32, #tpu.memory_space<vmem>>, vector<1x1xf32>
    tpu.vector_store %arg11[%c0_19, %c0_20], %44 {strides = array<i32>} : memref<1x1xf32, #tpu.memory_space<vmem>>, vector<1x1xf32>,
    %c0_21 = arith.constant 0 : index
    %c0_22 = arith.constant 0 : index
    %46 = vector.load %arg12[%c0_21, %c0_22] : memref<1x32xf32, #tpu.memory_space<vmem>>, vector<1x32xf32>
    %47 = vector.broadcast %36 : vector<1x1xf32> to vector<1x32xf32>
    %48 = arith.mulf %47, %46 : vector<1x32xf32>
    %49 = arith.truncf %39 : vector<1x16xf32> to vector<1x16xbf16>
    %cst_23 = arith.constant dense<0.000000e+00> : vector<1x32xf32>
    %50 = tpu.matmul %49, %3, %cst_23 {dimension_numbers = #tpu.dot_dimension_numbers<[1], [0], [0], [1], [0, 0, 1, 1], [], []>} : vector<1x16xbf16>, vector<16x32xbf16>, vector<1x32xf32> -> vector<1x32xf32>
    %51 = arith.addf %48, %50 : vector<1x32xf32>
    %c0_24 = arith.constant 0 : index
    %c0_25 = arith.constant 0 : index
    %52 = vector.load %arg12[%c0_24, %c0_25] : memref<1x32xf32, #tpu.memory_space<vmem>>, vector<1x32xf32>
    tpu.vector_store %arg12[%c0_24, %c0_25], %51 {strides = array<i32>} : memref<1x32xf32, #tpu.memory_space<vmem>>, vector<1x32xf32>,
    %c0_26 = arith.constant 0 : index
    %c0_27 = arith.constant 0 : index
    %53 = vector.load %arg10[%c0_26, %c0_27] : memref<1x1xf32, #tpu.memory_space<vmem>>, vector<1x1xf32>
    tpu.vector_store %arg10[%c0_26, %c0_27], %34 {strides = array<i32>} : memref<1x1xf32, #tpu.memory_space<vmem>>, vector<1x1xf32>,
    %c0_28 = arith.constant 0 : index
    %c0_29 = arith.constant 0 : index
    %c0_30 = arith.constant 0 : index
    %54 = vector.load %arg9[%c0_28, %c0_29, %c0_30] : memref<1x1x16xf32, #tpu.memory_space<vmem>>, vector<1x1x16xf32>
    %55 = vector.shape_cast %54 : vector<1x1x16xf32> to vector<1x16xf32>
    %56 = vector.shape_cast %30 : vector<1x16xf32> to vector<1x1x16xf32>
    tpu.vector_store %arg9[%c0_28, %c0_29, %c0_30], %56 {strides = array<i32>} : memref<1x1x16xf32, #tpu.memory_space<vmem>>, vector<1x1x16xf32>,
    %c0_i32_31 = arith.constant 0 : i32
    %57 = arith.cmpi eq, %arg0, %c0_i32_31 : i32
    %58 = arith.extui %57 : i1 to i32
    %c0_i32_32 = arith.constant 0 : i32
    %59 = arith.cmpi ne, %58, %c0_i32_32 : i32
    scf.if %59 {
      %c0_33 = arith.constant 0 : index
      %c0_34 = arith.constant 0 : index
      %60 = vector.load %arg12[%c0_33, %c0_34] : memref<1x32xf32, #tpu.memory_space<vmem>>, vector<1x32xf32>
      %c0_35 = arith.constant 0 : index
      %c0_36 = arith.constant 0 : index
      %61 = vector.load %arg11[%c0_35, %c0_36] : memref<1x1xf32, #tpu.memory_space<vmem>>, vector<1x1xf32>
      %62 = vector.broadcast %61 : vector<1x1xf32> to vector<1x32xf32>
      %63 = arith.divf %60, %62 : vector<1x32xf32>
      %c0_37 = arith.constant 0 : index
      %c0_38 = arith.constant 0 : index
      %64 = vector.load %arg6[%c0_37, %c0_38] : memref<32x4xf32, #tpu.memory_space<vmem>>, vector<32x4xf32>
      %cst_39 = arith.constant dense<0.000000e+00> : vector<1x4xf32>
      %65 = tpu.matmul %63, %64, %cst_39 {dimension_numbers = #tpu.dot_dimension_numbers<[1], [0], [0], [1], [0, 0, 1, 1], [], []>} : vector<1x32xf32>, vector<32x4xf32>, vector<1x4xf32> -> vector<1x4xf32>
      %c0_40 = arith.constant 0 : index
      %c0_41 = arith.constant 0 : index
      %66 = vector.load %arg7[%c0_40, %c0_41] : memref<1x4xf32, #tpu.memory_space<vmem>>, vector<1x4xf32>
      %67 = arith.addf %65, %66 : vector<1x4xf32>
      %c0_42 = arith.constant 0 : index
      %c0_43 = arith.constant 0 : index
      %68 = vector.load %arg8[%c0_42, %c0_43] : memref<1x4xf32, #tpu.memory_space<vmem>>, vector<1x4xf32>
      tpu.vector_store %arg8[%c0_42, %c0_43], %67 {strides = array<i32>} : memref<1x4xf32, #tpu.memory_space<vmem>>, vector<1x4xf32>,
    } else {
    }
    return
  }
  func.func @transform_0(%arg0: i32) -> (i32, i32) {
    %c0_i32 = arith.constant 0 : i32
    %c0_i32_0 = arith.constant 0 : i32
    return %arg0, %c0_i32 : i32, i32
  }
  func.func @transform_1(%arg0: i32) -> (i32, i32) {
    %c0_i32 = arith.constant 0 : i32
    %c0_i32_0 = arith.constant 0 : i32
    %c0_i32_1 = arith.constant 0 : i32
    return %c0_i32, %c0_i32_0 : i32, i32
  }
  func.func @transform_2(%arg0: i32) -> (i32, i32) {
    %c0_i32 = arith.constant 0 : i32
    %c0_i32_0 = arith.constant 0 : i32
    %c0_i32_1 = arith.constant 0 : i32
    return %c0_i32, %c0_i32_0 : i32, i32
  }
  func.func @transform_3(%arg0: i32) -> (i32, i32) {
    %c0_i32 = arith.constant 0 : i32
    %c0_i32_0 = arith.constant 0 : i32
    %c0_i32_1 = arith.constant 0 : i32
    return %c0_i32, %c0_i32_0 : i32, i32
  }
  func.func @transform_4(%arg0: i32) -> (i32, i32) {
    %c0_i32 = arith.constant 0 : i32
    %c0_i32_0 = arith.constant 0 : i32
    %c0_i32_1 = arith.constant 0 : i32
    return %c0_i32, %c0_i32_0 : i32, i32
  }
  func.func @transform_5(%arg0: i32) -> (i32, i32) {
    %c0_i32 = arith.constant 0 : i32
    %c0_i32_0 = arith.constant 0 : i32
    %c0_i32_1 = arith.constant 0 : i32
    return %c0_i32, %c0_i32_0 : i32, i32
  }
  func.func @transform_6(%arg0: i32) -> (i32, i32) {
    %c0_i32 = arith.constant 0 : i32
    %c0_i32_0 = arith.constant 0 : i32
    %c0_i32_1 = arith.constant 0 : i32
    return %c0_i32, %c0_i32_0 : i32, i32
  }
  func.func @transform_7(%arg0: i32) -> (i32, i32) {
    %c0_i32 = arith.constant 0 : i32
    %c0_i32_0 = arith.constant 0 : i32
    %c0_i32_1 = arith.constant 0 : i32
    return %c0_i32, %c0_i32_0 : i32, i32
  }
  func.func @transform_8(%arg0: i32) -> (i32, i32, i32) {
    %c0_i32 = arith.constant 0 : i32
    %c0_i32_0 = arith.constant 0 : i32
    %c0_i32_1 = arith.constant 0 : i32
    return %arg0, %c0_i32, %c0_i32_0 : i32, i32, i32
  }
  func.func @transform_9(%arg0: i32) -> (i32, i32) {
    %c0_i32 = arith.constant 0 : i32
    %c0_i32_0 = arith.constant 0 : i32
    %c0_i32_1 = arith.constant 0 : i32
    return %c0_i32, %c0_i32_0 : i32, i32
  }
  func.func @transform_10(%arg0: i32) -> (i32, i32) {
    %c0_i32 = arith.constant 0 : i32
    %c0_i32_0 = arith.constant 0 : i32
    %c0_i32_1 = arith.constant 0 : i32
    return %c0_i32, %c0_i32_0 : i32, i32
  }
}

</mosaic_0001>

<llo_original>
// kernel: tpu_custom_call.1
$region0: #{tpu_custom_call.1}
  #allocation0 [shape = 'u32[]', space=smem, size = 0x4, offset = 0x4, fixed_abs, tag = 'smem constant byte address 0x4 - core index']
  #allocation1 [shape = 'u32[144,128]{1,0:T(1,128)}', space=vmem, size = 0x12000, scoped, tag = 'internal scratch']
  #allocation2 [shape = 'f32[1,32]{1,0:T(1,128)}', space=vmem, size = 0x200, scoped, tag = 'scratch operand']
  #allocation3 [shape = 'f32[1,1]{1,0:T(1,128)S(1)}', space=vmem, size = 0x200, scoped, tag = 'scoped memory for tpu_custom_call.1']
  %s0 = inlined_call_operand.vmem [shape: bf16[16,32], index: 0, kind: input, shape index: {}]
  %s1 = inlined_call_operand.hbm [shape: bf16[32,512], index: 1, kind: input, shape index: {}]
  %s2 = inlined_call_operand.vmem [shape: f32[1,512], index: 2, kind: input, shape index: {}]
  %s3 = inlined_call_operand.vmem [shape: f32[1,256], index: 3, kind: input, shape index: {}]
  %s4 = inlined_call_operand.<no memory space> [shape: f32[1,1], index: 4, kind: input, shape index: {}]
  %s5 = inlined_call_operand.vmem [shape: f32[32,4], index: 5, kind: input, shape index: {}]
  %s6 = inlined_call_operand.vmem [shape: f32[1,4], index: 6, kind: input, shape index: {}]
  %s7 = inlined_call_operand.hbm [shape: f32[1,4], index: 7, kind: output, shape index: {0}]
  %s8 = inlined_call_operand.hbm [shape: f32[1,1,16], index: 8, kind: output, shape index: {1}]
  %s9 = inlined_call_operand.hbm [shape: f32[1,1], index: 9, kind: output, shape index: {2}]
  %s10 = inlined_call_operand.hbm [shape: f32[1,1], index: 10, kind: output, shape index: {3}]
  %11 = xla_tuple %s7, %s8, %s9, %s10
  %s12 = sld [smem:[#allocation0]]
  $region74: #{tpu_custom_call.1} parent=0
    _
  %s14 = ssub.s32 1, %s12
  %s15 = scalar_select 0, %s14, %s12
  %v16 = vstv %s4
  %17 = vst [vmem:[#allocation3] sm:$0x1] %v16
  $region1: #{tpu_custom_call.1} parent=0
    #allocation4 [shape = 'u8[32768]{0}', space=vmem, size = 0x8000, scoped, tag = 'input window, operand 1, single buffered']
    #allocation5 [shape = 's32[1]{0}', space=sflag, size = 0x4, scoped, tag = 'scoped memory for tpu_custom_call.1']
    #allocation6 [shape = 's32[1]{0}', space=sflag, size = 0x4, scoped, tag = 'scoped memory for tpu_custom_call.1']
    #allocation7 [shape = 'u8[512]{0}', space=vmem, size = 0x400, scoped, tag = 'output window, operand 0, single buffered']
    #allocation8 [shape = 'u8[512]{0}', space=vmem, size = 0x400, scoped, tag = 'output window, operand 1, single buffered']
    #allocation9 [shape = 's32[1]{0}', space=sflag, size = 0x4, scoped, tag = 'scoped memory for tpu_custom_call.1']
    #allocation10 [shape = 'u8[512]{0}', space=vmem, size = 0x400, scoped, tag = 'output window, operand 2, single buffered']
    #allocation11 [shape = 'u8[512]{0}', space=vmem, size = 0x400, scoped, tag = 'output window, operand 3, single buffered']
    #allocation12 [shape = 's32[1]{0}', space=sflag, size = 0x4, scoped, tag = 'scoped memory for tpu_custom_call.1']
    %18 = vsyncpa [#allocation5], 0
    %19 = vsyncpa [#allocation6], 0
    %20 = vsyncpa [#allocation9], 0
    %21 = vsyncpa [#allocation12], 0
    // Predicated region
    $region2: #{tpu_custom_call.1} parent=1 // pred_check
      _
    $region3: #{tpu_custom_call.1} parent=1 // pred_check_branch
      %23 = sbr.rel (0) target = $region5
    $region4: #{tpu_custom_call.1} parent=1 // pred_region
      _
    $region5: #{tpu_custom_call.1} parent=1 // pred_fallthru
      _
    // Predicated region
    $region6: #{tpu_custom_call.1} parent=1 // pred_check
      _
    $region7: #{tpu_custom_call.1} parent=1 // pred_check_branch
      %25 = sbr.rel (0) target = $region9
    $region8: #{tpu_custom_call.1} parent=1 // pred_region
      %s27 = ssub.s32 1024, 1024
      %28 = vsyncadd [#allocation5], %s27
      %s29 = sshll.u32 [#allocation4], 4
      %s30 = int_to_ptr.vmem [resolvable:$true] %s29
      %35 = dma.hbm_to_vmem [thread:$0]  %s1, 1024, %s30, [#allocation5], 256, 256, 16
    $region9: #{tpu_custom_call.1} parent=1 // pred_fallthru
      _
    // Predicated region
    $region10: #{tpu_custom_call.1} parent=1 // pred_check
      _
    $region11: #{tpu_custom_call.1} parent=1 // pred_check_branch
      %37 = sbr.rel (0) target = $region13
    $region12: #{tpu_custom_call.1} parent=1 // pred_region
      _
    $region13: #{tpu_custom_call.1} parent=1 // pred_fallthru
      _
    // Predicated region
    $region14: #{tpu_custom_call.1} parent=1 // pred_check
      _
    $region15: #{tpu_custom_call.1} parent=1 // pred_check_branch
      %39 = sbr.rel (0) target = $region17
    $region16: #{tpu_custom_call.1} parent=1 // pred_region
      _
    $region17: #{tpu_custom_call.1} parent=1 // pred_fallthru
      _
    // Predicated region
    $region18: #{tpu_custom_call.1} parent=1 // pred_check
      _
    $region19: #{tpu_custom_call.1} parent=1 // pred_check_branch
      %41 = sbr.rel (0) target = $region21
    $region20: #{tpu_custom_call.1} parent=1 // pred_region
      _
    $region21: #{tpu_custom_call.1} parent=1 // pred_fallthru
      _
    // Predicated region
    $region22: #{tpu_custom_call.1} parent=1 // pred_check
      _
    $region23: #{tpu_custom_call.1} parent=1 // pred_check_branch
      %43 = sbr.rel (0) target = $region25
    $region24: #{tpu_custom_call.1} parent=1 // pred_region
      _
    $region25: #{tpu_custom_call.1} parent=1 // pred_fallthru
      _
    // Predicated region
    $region26: #{tpu_custom_call.1} parent=1 // pred_check
      _
    $region27: #{tpu_custom_call.1} parent=1 // pred_check_branch
      %45 = sbr.rel (0) target = $region29
    $region28: #{tpu_custom_call.1} parent=1 // pred_region
      _
    $region29: #{tpu_custom_call.1} parent=1 // pred_fallthru
      _
    // Predicated region
    $region30: #{tpu_custom_call.1} parent=1 // pred_check
      _
    $region31: #{tpu_custom_call.1} parent=1 // pred_check_branch
      %47 = sbr.rel (0) target = $region33
    $region32: #{tpu_custom_call.1} parent=1 // pred_region
      %48 = dma.done [#allocation5], 1024
    $region33: #{tpu_custom_call.1} parent=1 // pred_fallthru
      _
    %p50 = scmp.eq.s32.totalorder 0, 0
    // Predicated region
    $region34: #{tpu_custom_call.1} parent=1 // pred_check
      %p51 = pneg %p50
    $region35: #{tpu_custom_call.1} parent=1 // pred_check_branch
      %53 = sbr.rel (%p51) target = $region37
    $region36: #{tpu_custom_call.1} parent=1 // pred_region
      %vm54 = vcmask 0
      %55 = vst.msk [vmem:[#allocation10] sm:$0x1] %vm54, -inf
      %56 = vst.msk [vmem:[#allocation11] sm:$0x1] %vm54, 0.0
      %vm57 = vcmask 253952
      %58 = vst.msk [vmem:[#allocation2] sm:$0x1] %vm57, 0.0
    $region37: #{tpu_custom_call.1} parent=1 // pred_fallthru
      _
    %v59 = vld [vmem:[%s0] sm:$0xf]
    %v60 = vld [vmem:[%s0 + $0x4] sm:$0xf]
    %v61 = vld [vmem:[#allocation4] sm:$0xff]
    %v62 = vld [vmem:[#allocation4 + $0x8] sm:$0xff]
    %v63 = vld [vmem:[#allocation4 + $0x10] sm:$0xff]
    %v64 = vld [vmem:[#allocation4 + $0x18] sm:$0xff]
    %v65 = vld [vmem:[#allocation4 + $0x20] sm:$0xff]
    %v66 = vld [vmem:[#allocation4 + $0x28] sm:$0xff]
    %v67 = vld [vmem:[#allocation4 + $0x30] sm:$0xff]
    %v68 = vld [vmem:[#allocation4 + $0x38] sm:$0xff]
    %v69 = vld [vmem:[%s2] sm:$0xf]
    %v71 = vlaneseq
    %v72 = vshrl.u32 %v71, 7
    %v73 = vsub.s32 0, %v72
    %v74 = vrot.slane %v69, %v73
    %v75 = vlaneseq
    %v76 = vshrl.u32 %v75, 7
    %v77 = vsub.s32 1, %v76
    %v78 = vrot.slane %v69, %v77
    %v79 = vlaneseq
    %v80 = vshrl.u32 %v79, 7
    %v81 = vsub.s32 2, %v80
    %v82 = vrot.slane %v69, %v81
    %v83 = vlaneseq
    %v84 = vshrl.u32 %v83, 7
    %v85 = vsub.s32 3, %v84
    %v86 = vrot.slane %v69, %v85
    %v93 = vunpack.c.l.b16 %v59
    %v94 = vunpack.c.l.b16 %v60
    %v95 = vpack.c.b16 %v94, %v93
    %v104 = vunpack.c.l.b16 %v61
    %v105 = vunpack.c.h.b16 %v61
    %v106 = vunpack.c.l.b16 %v62
    %v107 = vunpack.c.h.b16 %v62
    %v108 = vunpack.c.l.b16 %v63
    %v109 = vunpack.c.h.b16 %v63
    %v110 = vunpack.c.l.b16 %v64
    %v111 = vunpack.c.h.b16 %v64
    %v112 = vunpack.c.l.b16 %v65
    %v113 = vunpack.c.h.b16 %v65
    %v114 = vunpack.c.l.b16 %v66
    %v115 = vunpack.c.h.b16 %v66
    %v116 = vunpack.c.l.b16 %v67
    %v117 = vunpack.c.h.b16 %v67
    %v118 = vunpack.c.l.b16 %v68
    %v119 = vunpack.c.h.b16 %v68
    %v120 = vpack.c.b16 %v108, %v104
    %v121 = vpack.c.b16 %v109, %v105
    %v122 = vpack.c.b16 %v110, %v106
    %v123 = vpack.c.b16 %v111, %v107
    %v124 = vpack.c.b16 %v116, %v112
    %v125 = vpack.c.b16 %v117, %v113
    %v126 = vpack.c.b16 %v118, %v114
    %v127 = vpack.c.b16 %v119, %v115
    %vm136 = vcmask 261120
    %v138 = vsel %vm136, %v95, 0
    %140 = vmatprep.subr.bf16.mxu0 %v121
    %141 = vmatpush1.bf16.msra.mxu0 %v120
    %142 = vmatprep.subr.bf16.mxu0 %v125
    %143 = vmatpush1.bf16.msra.mxu0 %v124
    %144 = vmatprep.subr.bf16.mxu0 0
    %145 = vmatpush1.bf16.msra.mxu0 0
    %146 = vmatprep.subr.bf16.mxu0 0
    %147 = vmatpush1.bf16.msra.mxu0 0
    %148 = vmatprep.subr.bf16.mxu0 0
    %149 = vmatpush1.bf16.msra.mxu0 0
    %150 = vmatprep.subr.bf16.mxu0 0
    %151 = vmatpush1.bf16.msra.mxu0 0
    %152 = vmatprep.subr.bf16.mxu0 0
    %153 = vmatpush1.bf16.msra.mxu0 0
    %154 = vmatprep.subr.bf16.mxu0 0
    %155 = vmatpush1.bf16.msra.mxu0 0
    %156 = vmatprep.subr.bf16.mxu0 0
    %157 = vmatpush1.bf16.msra.mxu0 0
    %158 = vmatprep.subr.bf16.mxu0 0
    %159 = vmatpush1.bf16.msra.mxu0 0
    %160 = vmatprep.subr.bf16.mxu0 0
    %161 = vmatpush1.bf16.msra.mxu0 0
    %162 = vmatprep.subr.bf16.mxu0 0
    %163 = vmatpush1.bf16.msra.mxu0 0
    %164 = vmatprep.subr.bf16.mxu0 0
    %165 = vmatpush1.bf16.msra.mxu0 0
    %166 = vmatprep.subr.bf16.mxu0 0
    %167 = vmatpush1.bf16.msra.mxu0 0
    %168 = vmatprep.subr.bf16.mxu0 0
    %169 = vmatpush1.bf16.msra.mxu0 0
    %170 = vmatprep.subr.bf16.mxu0 0
    %171 = vmatpush1.bf16.msra.mxu0 0
    %172 = vmatprep.mubr.bf16.mxu0 0
    %173 = vmatmul.mubr.bf16.gmra.mrb[0].mxu0 %v138
    %v174 = vpop.f32.mrb[0].mxu0
    %v175 = vadd.f32 %v74, %v174
    %v176 = vpop.f32.mrb[0].mxu0
    %v177 = vadd.f32 %v78, %v176
    %v178 = vpop.f32.mrb[0].mxu0
    %v179 = vadd.f32 %v74, %v178
    %v180 = vpop.f32.mrb[0].mxu0
    %v181 = vadd.f32 %v78, %v180
    %182 = vdwg.mxu0
    %183 = vmatprep.subr.bf16.mxu0 %v123
    %184 = vmatpush1.bf16.msra.mxu0 %v122
    %185 = vmatprep.subr.bf16.mxu0 %v127
    %186 = vmatpush1.bf16.msra.mxu0 %v126
    %187 = vmatprep.subr.bf16.mxu0 0
    %188 = vmatpush1.bf16.msra.mxu0 0
    %189 = vmatprep.subr.bf16.mxu0 0
    %190 = vmatpush1.bf16.msra.mxu0 0
    %191 = vmatprep.subr.bf16.mxu0 0
    %192 = vmatpush1.bf16.msra.mxu0 0
    %193 = vmatprep.subr.bf16.mxu0 0
    %194 = vmatpush1.bf16.msra.mxu0 0
    %195 = vmatprep.subr.bf16.mxu0 0
    %196 = vmatpush1.bf16.msra.mxu0 0
    %197 = vmatprep.subr.bf16.mxu0 0
    %198 = vmatpush1.bf16.msra.mxu0 0
    %199 = vmatprep.subr.bf16.mxu0 0
    %200 = vmatpush1.bf16.msra.mxu0 0
    %201 = vmatprep.subr.bf16.mxu0 0
    %202 = vmatpush1.bf16.msra.mxu0 0
    %203 = vmatprep.subr.bf16.mxu0 0
    %204 = vmatpush1.bf16.msra.mxu0 0
    %205 = vmatprep.subr.bf16.mxu0 0
    %206 = vmatpush1.bf16.msra.mxu0 0
    %207 = vmatprep.subr.bf16.mxu0 0
    %208 = vmatpush1.bf16.msra.mxu0 0
    %209 = vmatprep.subr.bf16.mxu0 0
    %210 = vmatpush1.bf16.msra.mxu0 0
    %211 = vmatprep.subr.bf16.mxu0 0
    %212 = vmatpush1.bf16.msra.mxu0 0
    %213 = vmatprep.subr.bf16.mxu0 0
    %214 = vmatpush1.bf16.msra.mxu0 0
    %215 = vmatprep.mubr.bf16.mxu0 0
    %216 = vmatmul.mubr.bf16.gmra.mrb[0].mxu0 %v138
    %v217 = vpop.f32.mrb[0].mxu0
    %v218 = vadd.f32 %v82, %v217
    %v219 = vpop.f32.mrb[0].mxu0
    %v220 = vadd.f32 %v86, %v219
    %v221 = vpop.f32.mrb[0].mxu0
    %v222 = vadd.f32 %v82, %v221
    %v223 = vpop.f32.mrb[0].mxu0
    %v224 = vadd.f32 %v86, %v223
    %225 = vdwg.mxu0
    %v226 = vtanh.pop %v175
    %v227 = vtanh.pop %v177
    %v228 = vtanh.pop %v179
    %v229 = vtanh.pop %v181
    %v230 = vxor.u32 %v218, 2147483648
    %v231 = vxor.u32 %v220, 2147483648
    %v232 = vxor.u32 %v222, 2147483648
    %v233 = vxor.u32 %v224, 2147483648
    %v234 = vmul.f32 %v230, 1.442695
    %v235 = vpow.pop %v234
    %v236 = vmul.f32 %v231, 1.442695
    %v237 = vpow.pop %v236
    %v238 = vmul.f32 %v232, 1.442695
    %v239 = vpow.pop %v238
    %v240 = vmul.f32 %v233, 1.442695
    %v241 = vpow.pop %v240
    %v242 = vadd.f32 %v235, 1.0
    %v243 = vadd.f32 %v237, 1.0
    %v244 = vadd.f32 %v239, 1.0
    %v245 = vadd.f32 %v241, 1.0
    %v246 = vrcp.pop %v242
    %v247 = vmul.f32 1.0, %v246
    %v248 = vrcp.pop %v243
    %v249 = vmul.f32 1.0, %v248
    %v250 = vrcp.pop %v244
    %v251 = vmul.f32 1.0, %v250
    %v252 = vrcp.pop %v245
    %v253 = vmul.f32 1.0, %v252
    %v254 = vmul.f32 %v226, %v247
    %v255 = vmul.f32 %v227, %v249
    %v256 = vmul.f32 %v228, %v251
    %v257 = vmul.f32 %v229, %v253
    %v258 = vld [vmem:[%s3] sm:$0x3]
    %v259 = vld [vmem:[#allocation3] sm:$0x1]
    %261 = vset.pattern.permute.xlu0 0
    %262 = vperm.xlu0 %261, %v259
    %v263 = vpop.permute.xlu0 %262
    %v265 = vlaneseq
    %v266 = vshrl.u32 %v265, 7
    %v267 = vsub.s32 0, %v266
    %v268 = vrot.slane %v263, %v267
    %v270 = vlaneseq
    %v271 = vshrl.u32 %v270, 7
    %v272 = vsub.s32 0, %v271
    %v273 = vrot.slane %v258, %v272
    %v274 = vlaneseq
    %v275 = vshrl.u32 %v274, 7
    %v276 = vsub.s32 1, %v275
    %v277 = vrot.slane %v258, %v276
    %280 = vmatprep.subr.mxu0 %v255
    %281 = vmatpush1.xpose.msra.mxu0 %v254
    %282 = vmatprep.subr.mxu0 %v257
    %283 = vmatpush1.xpose.msra.mxu0 %v256
    %284 = vmatprep.subr.mxu0 0.0
    %285 = vmatpush1.xpose.msra.mxu0 0.0
    %286 = vmatprep.subr.mxu0 0.0
    %287 = vmatpush1.xpose.msra.mxu0 0.0
    %288 = vmatprep.subr.mxu0 0.0
    %289 = vmatpush1.xpose.msra.mxu0 0.0
    %290 = vmatprep.subr.mxu0 0.0
    %291 = vmatpush1.xpose.msra.mxu0 0.0
    %292 = vmatprep.subr.mxu0 0.0
    %293 = vmatpush1.xpose.msra.mxu0 0.0
    %294 = vmatprep.subr.mxu0 0.0
    %295 = vmatpush1.xpose.msra.mxu0 0.0
    %296 = vmatprep.subr.mxu0 0.0
    %297 = vmatpush1.xpose.msra.mxu0 0.0
    %298 = vmatprep.subr.mxu0 0.0
    %299 = vmatpush1.xpose.msra.mxu0 0.0
    %300 = vmatprep.subr.mxu0 0.0
    %301 = vmatpush1.xpose.msra.mxu0 0.0
    %302 = vmatprep.subr.mxu0 0.0
    %303 = vmatpush1.xpose.msra.mxu0 0.0
    %304 = vmatprep.subr.mxu0 0.0
    %305 = vmatpush1.xpose.msra.mxu0 0.0
    %306 = vmatprep.subr.mxu0 0.0
    %307 = vmatpush1.xpose.msra.mxu0 0.0
    %308 = vmatprep.subr.mxu0 0.0
    %309 = vmatpush1.xpose.msra.mxu0 0.0
    %310 = vmatprep.subr.mxu0 0.0
    %311 = vmatpush1.xpose.msra.mxu0 0.0
    %312 = vmatprep.subr.mxu0 0.0
    %313 = vmatpush1.xpose.msra.mxu0 0.0
    %314 = vmatprep.subr.mxu0 0.0
    %315 = vmatpush1.xpose.msra.mxu0 0.0
    %316 = vmatprep.subr.mxu0 0.0
    %317 = vmatpush1.xpose.msra.mxu0 0.0
    %318 = vmatprep.subr.mxu0 0.0
    %319 = vmatpush1.xpose.msra.mxu0 0.0
    %320 = vmatprep.subr.mxu0 0.0
    %321 = vmatpush1.xpose.msra.mxu0 0.0
    %322 = vmatprep.subr.mxu0 0.0
    %323 = vmatpush1.xpose.msra.mxu0 0.0
    %324 = vmatprep.subr.mxu0 0.0
    %325 = vmatpush1.xpose.msra.mxu0 0.0
    %326 = vmatprep.subr.mxu0 0.0
    %327 = vmatpush1.xpose.msra.mxu0 0.0
    %328 = vmatprep.subr.mxu0 0.0
    %329 = vmatpush1.xpose.msra.mxu0 0.0
    %330 = vmatprep.subr.mxu0 0.0
    %331 = vmatpush1.xpose.msra.mxu0 0.0
    %332 = vmatprep.subr.mxu0 0.0
    %333 = vmatpush1.xpose.msra.mxu0 0.0
    %334 = vmatprep.subr.mxu0 0.0
    %335 = vmatpush1.xpose.msra.mxu0 0.0
    %336 = vmatprep.subr.mxu0 0.0
    %337 = vmatpush1.xpose.msra.mxu0 0.0
    %338 = vmatprep.subr.mxu0 0.0
    %339 = vmatpush1.xpose.msra.mxu0 0.0
    %340 = vmatprep.subr.mxu0 0.0
    %341 = vmatpush1.xpose.msra.mxu0 0.0
    %342 = vmatprep.subr.mxu0 0.0
    %343 = vmatpush1.xpose.msra.mxu0 0.0
    %344 = vmatprep.mubr.f32.mxu0 %v277
    %345 = vmatmul.mubr.f32.gmra.mrb[0].mxu0 %v273
    %v346 = vpop.f32.mrb[0].mxu0
    %v347 = vadd.f32 %v268, %v346
    %v348 = vpop.f32.mrb[0].mxu0
    %349 = vdwg.mxu0
    %s350 = smul.u32 0, 16
    %v351 = vlaneseq
    %v352 = vand.u32 %v351, 127
    %v353 = vstv %s350
    %v354 = vadd.s32 %v353, %v352
    %vm355 = vcmp.lt.s32.totalorder %v354, 8
    %v356 = vsel %vm355, %v347, -1e+30
    %v357 = vld [vmem:[#allocation10] sm:$0x1]
    %vm358 = vcmask 122880
    %v359 = vsel %vm358, %v356, -inf
    %360 = vmax.xlane.f32.xlu0 %v359
    %v361 = vpop.xlane.xlu0 %360
    %v362 = vmax.f32 %v357, %v361
    %v363 = vsub.f32 %v357, %v362
    %v364 = vmul.f32 %v363, 1.442695
    %v365 = vpow.pop %v364
    %367 = vset.pattern.permute.xlu0 0
    %368 = vperm.xlu0 %367, %v362
    %v369 = vpop.permute.xlu0 %368
    %v371 = vlaneseq
    %v372 = vshrl.u32 %v371, 7
    %v373 = vsub.s32 0, %v372
    %v374 = vrot.slane %v369, %v373
    %v375 = vsub.f32 %v356, %v374
    %v376 = vmul.f32 %v375, 1.442695
    %v377 = vpow.pop %v376
    %v378 = vld [vmem:[#allocation11] sm:$0x1]
    %v379 = vmul.f32 %v365, %v378
    %v380 = vsel %vm358, %v377, 0.0
    %381 = vadd.xlane.f32.xlu0 %v380
    %v382 = vpop.xlane.xlu0 %381
    %v383 = vadd.f32 %v379, %v382
    %vm384 = vcmask 0
    %385 = vst.msk [vmem:[#allocation11] sm:$0x1] %vm384, %v383
    %v386 = vld [vmem:[#allocation2] sm:$0x1]
    %388 = vset.pattern.permute.xlu0 0
    %389 = vperm.xlu0 %388, %v365
    %v390 = vpop.permute.xlu0 %389
    %v392 = vlaneseq
    %v393 = vshrl.u32 %v392, 7
    %v394 = vsub.s32 0, %v393
    %v395 = vrot.slane %v390, %v394
    %v396 = vmul.f32 %v395, %v386
    %v397 = vpack.c.bf16 %v377, %v377
    %vm399 = vcmask 130048
    %v401 = vsel %vm399, %v397, 0
    %403 = vmatprep.subr.bf16.mxu0 0
    %404 = vmatpush1.bf16.msra.mxu0 %v95
    %405 = vmatprep.subr.bf16.mxu0 0
    %406 = vmatpush1.bf16.msra.mxu0 0
    %407 = vmatprep.subr.bf16.mxu0 0
    %408 = vmatpush1.bf16.msra.mxu0 0
    %409 = vmatprep.subr.bf16.mxu0 0
    %410 = vmatpush1.bf16.msra.mxu0 0
    %411 = vmatprep.subr.bf16.mxu0 0
    %412 = vmatpush1.bf16.msra.mxu0 0
    %413 = vmatprep.subr.bf16.mxu0 0
    %414 = vmatpush1.bf16.msra.mxu0 0
    %415 = vmatprep.subr.bf16.mxu0 0
    %416 = vmatpush1.bf16.msra.mxu0 0
    %417 = vmatprep.subr.bf16.mxu0 0
    %418 = vmatpush1.bf16.msra.mxu0 0
    %419 = vmatprep.subr.bf16.mxu0 0
    %420 = vmatpush1.bf16.msra.mxu0 0
    %421 = vmatprep.subr.bf16.mxu0 0
    %422 = vmatpush1.bf16.msra.mxu0 0
    %423 = vmatprep.subr.bf16.mxu0 0
    %424 = vmatpush1.bf16.msra.mxu0 0
    %425 = vmatprep.subr.bf16.mxu0 0
    %426 = vmatpush1.bf16.msra.mxu0 0
    %427 = vmatprep.subr.bf16.mxu0 0
    %428 = vmatpush1.bf16.msra.mxu0 0
    %429 = vmatprep.subr.bf16.mxu0 0
    %430 = vmatpush1.bf16.msra.mxu0 0
    %431 = vmatprep.subr.bf16.mxu0 0
    %432 = vmatpush1.bf16.msra.mxu0 0
    %433 = vmatprep.subr.bf16.mxu0 0
    %434 = vmatpush1.bf16.msra.mxu0 0
    %435 = vmatprep.mubr.bf16.mxu0 0
    %436 = vmatmul.mubr.bf16.gmra.mrb[0].mxu0 %v401
    %v437 = vpop.f32.mrb[0].mxu0
    %v438 = vadd.f32 0.0, %v437
    %v439 = vpop.f32.mrb[0].mxu0
    %v440 = vpop.f32.mrb[0].mxu0
    %v441 = vpop.f32.mrb[0].mxu0
    %442 = vdwg.mxu0
    %v443 = vadd.f32 %v396, %v438
    %vm444 = vcmask 253952
    %445 = vst.msk [vmem:[#allocation2] sm:$0x1] %vm444, %v443
    %446 = vst.msk [vmem:[#allocation10] sm:$0x1] %vm384, %v362
    %447 = vst.msk [vmem:[#allocation8] sm:$0x1] %vm358, %v356
    // Predicated region
    $region38: #{tpu_custom_call.1} parent=1 // pred_check
      %p448 = pneg %p50
    $region39: #{tpu_custom_call.1} parent=1 // pred_check_branch
      %450 = sbr.rel (%p448) target = $region41
    $region40: #{tpu_custom_call.1} parent=1 // pred_region
      %v451 = vld [vmem:[#allocation2] sm:$0x1]
      %v452 = vld [vmem:[#allocation11] sm:$0x1]
      %454 = vset.pattern.permute.xlu0 0
      %455 = vperm.xlu0 %454, %v452
      %v456 = vpop.permute.xlu0 %455
      %v458 = vlaneseq
      %v459 = vshrl.u32 %v458, 7
      %v460 = vsub.s32 0, %v459
      %v461 = vrot.slane %v456, %v460
      %v462 = vrcp.pop %v461
      %v463 = vmul.f32 %v451, %v462
      %v464 = vld [vmem:[%s5] sm:$0xff]
      %v465 = vld [vmem:[%s5 + $0x8] sm:$0xff]
      %v466 = vld [vmem:[%s5 + $0x10] sm:$0xff]
      %v467 = vld [vmem:[%s5 + $0x18] sm:$0xff]
      %v468 = vld [vmem:[%s6] sm:$0x1]
      %v470 = vsel %vm136, %v463, 0
      %472 = vmatprep.subr.mxu0 0.0
      %473 = vmatpush1.msra.mxu0 %v464
      %474 = vmatprep.subr.mxu0 0.0
      %475 = vmatpush1.msra.mxu0 %v465
      %476 = vmatprep.subr.mxu0 0.0
      %477 = vmatpush1.msra.mxu0 %v466
      %478 = vmatprep.subr.mxu0 0.0
      %479 = vmatpush1.msra.mxu0 %v467
      %480 = vmatprep.subr.mxu0 0.0
      %481 = vmatpush1.msra.mxu0 0.0
      %482 = vmatprep.subr.mxu0 0.0
      %483 = vmatpush1.msra.mxu0 0.0
      %484 = vmatprep.subr.mxu0 0.0
      %485 = vmatpush1.msra.mxu0 0.0
      %486 = vmatprep.subr.mxu0 0.0
      %487 = vmatpush1.msra.mxu0 0.0
      %488 = vmatprep.subr.mxu0 0.0
      %489 = vmatpush1.msra.mxu0 0.0
      %490 = vmatprep.subr.mxu0 0.0
      %491 = vmatpush1.msra.mxu0 0.0
      %492 = vmatprep.subr.mxu0 0.0
      %493 = vmatpush1.msra.mxu0 0.0
      %494 = vmatprep.subr.mxu0 0.0
      %495 = vmatpush1.msra.mxu0 0.0
      %496 = vmatprep.subr.mxu0 0.0
      %497 = vmatpush1.msra.mxu0 0.0
      %498 = vmatprep.subr.mxu0 0.0
      %499 = vmatpush1.msra.mxu0 0.0
      %500 = vmatprep.subr.mxu0 0.0
      %501 = vmatpush1.msra.mxu0 0.0
      %502 = vmatprep.subr.mxu0 0.0
      %503 = vmatpush1.msra.mxu0 0.0
      %504 = vmatprep.subr.mxu0 0.0
      %505 = vmatpush1.msra.mxu0 0.0
      %506 = vmatprep.subr.mxu0 0.0
      %507 = vmatpush1.msra.mxu0 0.0
      %508 = vmatprep.subr.mxu0 0.0
      %509 = vmatpush1.msra.mxu0 0.0
      %510 = vmatprep.subr.mxu0 0.0
      %511 = vmatpush1.msra.mxu0 0.0
      %512 = vmatprep.subr.mxu0 0.0
      %513 = vmatpush1.msra.mxu0 0.0
      %514 = vmatprep.subr.mxu0 0.0
      %515 = vmatpush1.msra.mxu0 0.0
      %516 = vmatprep.subr.mxu0 0.0
      %517 = vmatpush1.msra.mxu0 0.0
      %518 = vmatprep.subr.mxu0 0.0
      %519 = vmatpush1.msra.mxu0 0.0
      %520 = vmatprep.subr.mxu0 0.0
      %521 = vmatpush1.msra.mxu0 0.0
      %522 = vmatprep.subr.mxu0 0.0
      %523 = vmatpush1.msra.mxu0 0.0
      %524 = vmatprep.subr.mxu0 0.0
      %525 = vmatpush1.msra.mxu0 0.0
      %526 = vmatprep.subr.mxu0 0.0
      %527 = vmatpush1.msra.mxu0 0.0
      %528 = vmatprep.subr.mxu0 0.0
      %529 = vmatpush1.msra.mxu0 0.0
      %530 = vmatprep.subr.mxu0 0.0
      %531 = vmatpush1.msra.mxu0 0.0
      %532 = vmatprep.subr.mxu0 0.0
      %533 = vmatpush1.msra.mxu0 0.0
      %534 = vmatprep.subr.mxu0 0.0
      %535 = vmatpush1.msra.mxu0 0.0
      %536 = vmatprep.mubr.f32.mxu0 0.0
      %537 = vmatmul.mubr.f32.gmra.mrb[0].mxu0 %v470
      %v538 = vpop.f32.mrb[0].mxu0
      %v539 = vadd.f32 %v468, %v538
      %v540 = vpop.f32.mrb[0].mxu0
      %541 = vdwg.mxu0
      %vm542 = vcmask 24576
      %543 = vst.msk [vmem:[#allocation7] sm:$0x1] %vm542, %v539
    $region41: #{tpu_custom_call.1} parent=1 // pred_fallthru
      _
    // Predicated region
    $region42: #{tpu_custom_call.1} parent=1 // pred_check
      _
    $region43: #{tpu_custom_call.1} parent=1 // pred_check_branch
      %545 = sbr.rel (0) target = $region45
    $region44: #{tpu_custom_call.1} parent=1 // pred_region
      %s547 = ssub.s32 16, 16
      %548 = vsyncadd [#allocation6], %s547
      %s550 = sshll.u32 [#allocation7], 4
      %s551 = int_to_ptr.vmem [resolvable:$true] %s550
      %553 = dma.vmem_to_hbm [thread:$0]  %s551, 16, %s7, [#allocation6]
    $region45: #{tpu_custom_call.1} parent=1 // pred_fallthru
      _
    // Predicated region
    $region46: #{tpu_custom_call.1} parent=1 // pred_check
      _
    $region47: #{tpu_custom_call.1} parent=1 // pred_check_branch
      %555 = sbr.rel (0) target = $region49
    $region48: #{tpu_custom_call.1} parent=1 // pred_region
      %s557 = ssub.s32 16, 16
      %558 = vsyncadd [#allocation9], %s557
      %s560 = sshll.u32 [#allocation8], 4
      %s561 = int_to_ptr.vmem [resolvable:$true] %s560
      %563 = dma.vmem_to_hbm [thread:$0]  %s561, 16, %s8, [#allocation9]
    $region49: #{tpu_custom_call.1} parent=1 // pred_fallthru
      _
    // Predicated region
    $region50: #{tpu_custom_call.1} parent=1 // pred_check
      _
    $region51: #{tpu_custom_call.1} parent=1 // pred_check_branch
      %565 = sbr.rel (0) target = $region53
    $region52: #{tpu_custom_call.1} parent=1 // pred_region
      %s567 = ssub.s32 16, 16
      %568 = vsyncadd [#allocation9], %s567
      %s570 = sshll.u32 [#allocation10], 4
      %s571 = int_to_ptr.vmem [resolvable:$true] %s570
      %573 = dma.vmem_to_hbm [thread:$0]  %s571, 16, %s9, [#allocation9]
    $region53: #{tpu_custom_call.1} parent=1 // pred_fallthru
      _
    // Predicated region
    $region54: #{tpu_custom_call.1} parent=1 // pred_check
      _
    $region55: #{tpu_custom_call.1} parent=1 // pred_check_branch
      %575 = sbr.rel (0) target = $region57
    $region56: #{tpu_custom_call.1} parent=1 // pred_region
      %s577 = ssub.s32 16, 16
      %578 = vsyncadd [#allocation12], %s577
      %s580 = sshll.u32 [#allocation11], 4
      %s581 = int_to_ptr.vmem [resolvable:$true] %s580
      %583 = dma.vmem_to_hbm [thread:$0]  %s581, 16, %s10, [#allocation12]
    $region57: #{tpu_custom_call.1} parent=1 // pred_fallthru
      _
    // Predicated region
    $region58: #{tpu_custom_call.1} parent=1 // pred_check
      _
    $region59: #{tpu_custom_call.1} parent=1 // pred_check_branch
      %585 = sbr.rel (0) target = $region61
    $region60: #{tpu_custom_call.1} parent=1 // pred_region
      %586 = dma.done [#allocation6], 16
    $region61: #{tpu_custom_call.1} parent=1 // pred_fallthru
      _
    // Predicated region
    $region62: #{tpu_custom_call.1} parent=1 // pred_check
      _
    $region63: #{tpu_custom_call.1} parent=1 // pred_check_branch
      %588 = sbr.rel (0) target = $region65
    $region64: #{tpu_custom_call.1} parent=1 // pred_region
      %589 = dma.done [#allocation9], 16
    $region65: #{tpu_custom_call.1} parent=1 // pred_fallthru
      _
    // Predicated region
    $region66: #{tpu_custom_call.1} parent=1 // pred_check
      _
    $region67: #{tpu_custom_call.1} parent=1 // pred_check_branch
      %591 = sbr.rel (0) target = $region69
    $region68: #{tpu_custom_call.1} parent=1 // pred_region
      %592 = dma.done [#allocation9], 16
    $region69: #{tpu_custom_call.1} parent=1 // pred_fallthru
      _
    // Predicated region
    $region70: #{tpu_custom_call.1} parent=1 // pred_check
      _
    $region71: #{tpu_custom_call.1} parent=1 // pred_check_branch
      %594 = sbr.rel (0) target = $region73
    $region72: #{tpu_custom_call.1} parent=1 // pred_region
      %595 = dma.done [#allocation12], 16
    $region73: #{tpu_custom_call.1} parent=1 // pred_fallthru
      _
    %596 = vsyncpa [#allocation5], 1
    %597 = vsyncpa [#allocation6], 1
    %598 = vsyncpa [#allocation9], 1
    %599 = vsyncpa [#allocation12], 1

</llo_original>
